<compile_context>
chip_gen: v6e
topology: v6e:2x2x1
jax: 0.10.0
libtpu: 0.0.40
codegen_flags: <defaults>
</compile_context>

<pallas_src>
import jax
import jax.numpy as jnp
from jax.experimental import pallas as pl
from jax.experimental.pallas import tpu as pltpu


def rnn_fc_kernel(x_ref, wih_ref, whh_ref, b_ref, wfc_ref, bfc_ref,
                  out_ref, xw_ref):
    """Single-program kernel: hoisted projection + recurrence + final linear.

    x_ref   : (T*B, I)  time-major inputs, flattened (row block t*B..t*B+B = step t)
    wih_ref : (I, H)    input->hidden weights (pre-transposed)
    whh_ref : (H, H)    hidden->hidden weights (pre-transposed)
    b_ref   : (1, H)    combined bias (b_ih + b_hh)
    wfc_ref : (O, H)    fc weights (PyTorch layout)
    bfc_ref : (1, O)    fc bias
    out_ref : (B, O)
    xw_ref  : (T*B, H)  f32 VMEM scratch holding the precomputed input projection
    """
    B = out_ref.shape[0]
    TB = x_ref.shape[0]
    T = TB // B
    H = whh_ref.shape[0]
    O = out_ref.shape[1]

    # (1) One MXU matmul for all T timesteps; bias folded in here (not in loop).
    xw_ref[...] = (jnp.dot(x_ref[...], wih_ref[...],
                           preferred_element_type=jnp.float32)
                   + b_ref[...])

    # (2) Fully unrolled recurrence.  Each xw slice is a static view of the
    #     VMEM scratch; the only carried value is the (B, H) hidden state.
    whh = whh_ref[...]
    h = jnp.zeros((B, H), jnp.float32)
    for t in range(T):
        xw_t = xw_ref[t * B:(t + 1) * B, :]                    # static slice
        h = jnp.tanh(xw_t + jnp.dot(h, whh,
                                    preferred_element_type=jnp.float32))

    # (3) Final linear layer.  For O == 1, a VPU multiply + lane reduction
    #     (skips a 1-lane MXU matmul and its masked-store round trip).
    if O == 1:
        out = jnp.sum(h * wfc_ref[...], axis=-1, keepdims=True) + bfc_ref[...]
    else:
        out = jnp.dot(h, wfc_ref[...].T,
                      preferred_element_type=jnp.float32) + bfc_ref[...]
    out_ref[...] = out.astype(out_ref.dtype)


@jax.jit
def simple_rnn_forward(x_btI, w_ih, w_hh, b_ih, b_hh, w_fc, b_fc):
    """x_btI: (B, T, I) float32, PyTorch batch_first convention."""
    B, T, I = x_btI.shape
    H = w_hh.shape[0]
    O = w_fc.shape[0]

    # Layout glue in plain JAX: time-major, flattened to (T*B, I) so the kernel
    # performs a single row-major projection matmul; weights pre-transposed.
    x_2d = jnp.transpose(x_btI, (1, 0, 2)).reshape(T * B, I)   # (T*B, I)
    wih_t = w_ih.T                                             # (I, H)
    whh_t = w_hh.T                                             # (H, H)
    b_comb = (b_ih + b_hh).reshape(1, H)                       # (1, H)
    wfc = w_fc.reshape(O, H)                                   # (O, H)
    bfc = b_fc.reshape(1, O)                                   # (1, O)

    out = pl.pallas_call(
        rnn_fc_kernel,
        out_shape=jax.ShapeDtypeStruct((B, O), jnp.float32),
        grid_spec=pltpu.PrefetchScalarGridSpec(
            num_scalar_prefetch=0,
            grid=(1,),
            in_specs=[
                pl.BlockSpec((T * B, I), lambda i: (0, 0)),
                pl.BlockSpec((I, H), lambda i: (0, 0)),
                pl.BlockSpec((H, H), lambda i: (0, 0)),
                pl.BlockSpec((1, H), lambda i: (0, 0)),
                pl.BlockSpec((O, H), lambda i: (0, 0)),
                pl.BlockSpec((1, O), lambda i: (0, 0)),
            ],
            out_specs=pl.BlockSpec((B, O), lambda i: (0, 0)),
            scratch_shapes=[pltpu.VMEM((T * B, H), jnp.float32)],
        ),
        compiler_params=pltpu.CompilerParams(
            dimension_semantics=("arbitrary",)),
    )(x_2d, wih_t, whh_t, b_comb, wfc, bfc)
    return out


def reference_forward(x_btI, w_ih, w_hh, b_ih, b_hh, w_fc, b_fc):
    """Pure-JAX reference matching torch.nn.RNN(batch_first=True) + Linear."""
    B, T, I = x_btI.shape
    H = w_hh.shape[0]
    h = jnp.zeros((B, H), jnp.float32)
    for t in range(T):
        x_t = x_btI[:, t, :]
        h = jnp.tanh(x_t @ w_ih.T + b_ih + h @ w_hh.T + b_hh)
    return h @ w_fc.T + b_fc


if __name__ == "__main__":
    input_size = 5
    hidden_size = 64
    output_size = 1
    B, T = 2, 8

    key = jax.random.PRNGKey(0)
    ks = jax.random.split(key, 8)
    bound = 1.0 / jnp.sqrt(hidden_size)

    # Deterministic parameter init (PyTorch-style uniform(-1/sqrt(H), 1/sqrt(H))).
    w_ih = jax.random.uniform(ks[0], (hidden_size, input_size), jnp.float32, -bound, bound)
    w_hh = jax.random.uniform(ks[1], (hidden_size, hidden_size), jnp.float32, -bound, bound)
    b_ih = jax.random.uniform(ks[2], (hidden_size,), jnp.float32, -bound, bound)
    b_hh = jax.random.uniform(ks[3], (hidden_size,), jnp.float32, -bound, bound)
    w_fc = jax.random.uniform(ks[4], (output_size, hidden_size), jnp.float32, -bound, bound)
    b_fc = jax.random.uniform(ks[5], (output_size,), jnp.float32, -bound, bound)

    x = jax.random.normal(ks[6], (B, T, input_size), jnp.float32)

    out = simple_rnn_forward(x, w_ih, w_hh, b_ih, b_hh, w_fc, b_fc)
    out = jax.block_until_ready(out)

    ref = reference_forward(x, w_ih, w_hh, b_ih, b_hh, w_fc, b_fc)
    assert out.shape == (B, output_size)
    assert jnp.allclose(out, ref, atol=1e-5, rtol=1e-5), (out, ref)

    print("KERNEL_OK")
</pallas_src>

<mosaic_0001>
module attributes {stable_mosaic.version = 11 : i64} {
  func.func @rnn_fc_kernel(%arg0: i32, %arg1: memref<16x5xf32, #tpu.memory_space<vmem>>, %arg2: memref<5x64xf32, #tpu.memory_space<vmem>>, %arg3: memref<64x64xf32, #tpu.memory_space<vmem>>, %arg4: memref<1x64xf32, #tpu.memory_space<vmem>>, %arg5: memref<1x64xf32, #tpu.memory_space<vmem>>, %arg6: memref<1x1xf32, #tpu.memory_space<vmem>>, %arg7: memref<2x1xf32, #tpu.memory_space<vmem>>, %arg8: memref<16x64xf32, #tpu.memory_space<vmem>>) attributes {dimension_semantics = [#tpu.dimension_semantics<arbitrary>], iteration_bounds = array<i64: 1>, scalar_prefetch = 0 : i64, scratch_operands = 1 : i64, tpu.core_type = #tpu.core_type<tc>, window_params = [{pipeline_mode = #tpu.pipeline_mode<synchronous>, transform_indices = @transform_0, window_bounds = array<i64: 16, 5>}, {pipeline_mode = #tpu.pipeline_mode<synchronous>, transform_indices = @transform_1, window_bounds = array<i64: 5, 64>}, {pipeline_mode = #tpu.pipeline_mode<synchronous>, transform_indices = @transform_2, window_bounds = array<i64: 64, 64>}, {pipeline_mode = #tpu.pipeline_mode<synchronous>, transform_indices = @transform_3, window_bounds = array<i64: 1, 64>}, {pipeline_mode = #tpu.pipeline_mode<synchronous>, transform_indices = @transform_4, window_bounds = array<i64: 1, 64>}, {pipeline_mode = #tpu.pipeline_mode<synchronous>, transform_indices = @transform_5, window_bounds = array<i64: 1, 1>}, {pipeline_mode = #tpu.pipeline_mode<synchronous>, transform_indices = @transform_6, window_bounds = array<i64: 2, 1>}]} {
    %c0 = arith.constant 0 : index
    %c0_0 = arith.constant 0 : index
    %0 = vector.load %arg1[%c0, %c0_0] : memref<16x5xf32, #tpu.memory_space<vmem>>, vector<16x5xf32>
    %c0_1 = arith.constant 0 : index
    %c0_2 = arith.constant 0 : index
    %1 = vector.load %arg2[%c0_1, %c0_2] : memref<5x64xf32, #tpu.memory_space<vmem>>, vector<5x64xf32>
    %cst = arith.constant dense<0.000000e+00> : vector<16x64xf32>
    %2 = tpu.matmul %0, %1, %cst {dimension_numbers = #tpu.dot_dimension_numbers<[1], [0], [0], [1], [0, 0, 1, 1], [], []>} : vector<16x5xf32>, vector<5x64xf32>, vector<16x64xf32> -> vector<16x64xf32>
    %c0_3 = arith.constant 0 : index
    %c0_4 = arith.constant 0 : index
    %3 = vector.load %arg4[%c0_3, %c0_4] : memref<1x64xf32, #tpu.memory_space<vmem>>, vector<1x64xf32>
    %4 = vector.broadcast %3 : vector<1x64xf32> to vector<16x64xf32>
    %5 = arith.addf %2, %4 : vector<16x64xf32>
    %c0_5 = arith.constant 0 : index
    %c0_6 = arith.constant 0 : index
    %6 = vector.load %arg8[%c0_5, %c0_6] : memref<16x64xf32, #tpu.memory_space<vmem>>, vector<16x64xf32>
    tpu.vector_store %arg8[%c0_5, %c0_6], %5 {strides = array<i32>} : memref<16x64xf32, #tpu.memory_space<vmem>>, vector<16x64xf32>,
    %c0_7 = arith.constant 0 : index
    %c0_8 = arith.constant 0 : index
    %7 = vector.load %arg3[%c0_7, %c0_8] : memref<64x64xf32, #tpu.memory_space<vmem>>, vector<64x64xf32>
    %cst_9 = arith.constant 0.000000e+00 : f32
    %8 = vector.broadcast %cst_9 : f32 to vector<2x64xf32>
    %c0_10 = arith.constant 0 : index
    %c0_11 = arith.constant 0 : index
    %9 = vector.load %arg8[%c0_10, %c0_11] : memref<16x64xf32, #tpu.memory_space<vmem>>, vector<2x64xf32>
    %cst_12 = arith.constant dense<0.000000e+00> : vector<2x64xf32>
    %10 = tpu.matmul %8, %7, %cst_12 {dimension_numbers = #tpu.dot_dimension_numbers<[1], [0], [0], [1], [0, 0, 1, 1], [], []>} : vector<2x64xf32>, vector<64x64xf32>, vector<2x64xf32> -> vector<2x64xf32>
    %11 = arith.addf %9, %10 : vector<2x64xf32>
    %12 = math.tanh %11 : vector<2x64xf32>
    %c2 = arith.constant 2 : index
    %c0_13 = arith.constant 0 : index
    %13 = vector.load %arg8[%c2, %c0_13] : memref<16x64xf32, #tpu.memory_space<vmem>>, vector<2x64xf32>
    %cst_14 = arith.constant dense<0.000000e+00> : vector<2x64xf32>
    %14 = tpu.matmul %12, %7, %cst_14 {dimension_numbers = #tpu.dot_dimension_numbers<[1], [0], [0], [1], [0, 0, 1, 1], [], []>} : vector<2x64xf32>, vector<64x64xf32>, vector<2x64xf32> -> vector<2x64xf32>
    %15 = arith.addf %13, %14 : vector<2x64xf32>
    %16 = math.tanh %15 : vector<2x64xf32>
    %c4 = arith.constant 4 : index
    %c0_15 = arith.constant 0 : index
    %17 = vector.load %arg8[%c4, %c0_15] : memref<16x64xf32, #tpu.memory_space<vmem>>, vector<2x64xf32>
    %cst_16 = arith.constant dense<0.000000e+00> : vector<2x64xf32>
    %18 = tpu.matmul %16, %7, %cst_16 {dimension_numbers = #tpu.dot_dimension_numbers<[1], [0], [0], [1], [0, 0, 1, 1], [], []>} : vector<2x64xf32>, vector<64x64xf32>, vector<2x64xf32> -> vector<2x64xf32>
    %19 = arith.addf %17, %18 : vector<2x64xf32>
    %20 = math.tanh %19 : vector<2x64xf32>
    %c6 = arith.constant 6 : index
    %c0_17 = arith.constant 0 : index
    %21 = vector.load %arg8[%c6, %c0_17] : memref<16x64xf32, #tpu.memory_space<vmem>>, vector<2x64xf32>
    %cst_18 = arith.constant dense<0.000000e+00> : vector<2x64xf32>
    %22 = tpu.matmul %20, %7, %cst_18 {dimension_numbers = #tpu.dot_dimension_numbers<[1], [0], [0], [1], [0, 0, 1, 1], [], []>} : vector<2x64xf32>, vector<64x64xf32>, vector<2x64xf32> -> vector<2x64xf32>
    %23 = arith.addf %21, %22 : vector<2x64xf32>
    %24 = math.tanh %23 : vector<2x64xf32>
    %c8 = arith.constant 8 : index
    %c0_19 = arith.constant 0 : index
    %25 = vector.load %arg8[%c8, %c0_19] : memref<16x64xf32, #tpu.memory_space<vmem>>, vector<2x64xf32>
    %cst_20 = arith.constant dense<0.000000e+00> : vector<2x64xf32>
    %26 = tpu.matmul %24, %7, %cst_20 {dimension_numbers = #tpu.dot_dimension_numbers<[1], [0], [0], [1], [0, 0, 1, 1], [], []>} : vector<2x64xf32>, vector<64x64xf32>, vector<2x64xf32> -> vector<2x64xf32>
    %27 = arith.addf %25, %26 : vector<2x64xf32>
    %28 = math.tanh %27 : vector<2x64xf32>
    %c10 = arith.constant 10 : index
    %c0_21 = arith.constant 0 : index
    %29 = vector.load %arg8[%c10, %c0_21] : memref<16x64xf32, #tpu.memory_space<vmem>>, vector<2x64xf32>
    %cst_22 = arith.constant dense<0.000000e+00> : vector<2x64xf32>
    %30 = tpu.matmul %28, %7, %cst_22 {dimension_numbers = #tpu.dot_dimension_numbers<[1], [0], [0], [1], [0, 0, 1, 1], [], []>} : vector<2x64xf32>, vector<64x64xf32>, vector<2x64xf32> -> vector<2x64xf32>
    %31 = arith.addf %29, %30 : vector<2x64xf32>
    %32 = math.tanh %31 : vector<2x64xf32>
    %c12 = arith.constant 12 : index
    %c0_23 = arith.constant 0 : index
    %33 = vector.load %arg8[%c12, %c0_23] : memref<16x64xf32, #tpu.memory_space<vmem>>, vector<2x64xf32>
    %cst_24 = arith.constant dense<0.000000e+00> : vector<2x64xf32>
    %34 = tpu.matmul %32, %7, %cst_24 {dimension_numbers = #tpu.dot_dimension_numbers<[1], [0], [0], [1], [0, 0, 1, 1], [], []>} : vector<2x64xf32>, vector<64x64xf32>, vector<2x64xf32> -> vector<2x64xf32>
    %35 = arith.addf %33, %34 : vector<2x64xf32>
    %36 = math.tanh %35 : vector<2x64xf32>
    %c14 = arith.constant 14 : index
    %c0_25 = arith.constant 0 : index
    %37 = vector.load %arg8[%c14, %c0_25] : memref<16x64xf32, #tpu.memory_space<vmem>>, vector<2x64xf32>
    %cst_26 = arith.constant dense<0.000000e+00> : vector<2x64xf32>
    %38 = tpu.matmul %36, %7, %cst_26 {dimension_numbers = #tpu.dot_dimension_numbers<[1], [0], [0], [1], [0, 0, 1, 1], [], []>} : vector<2x64xf32>, vector<64x64xf32>, vector<2x64xf32> -> vector<2x64xf32>
    %39 = arith.addf %37, %38 : vector<2x64xf32>
    %40 = math.tanh %39 : vector<2x64xf32>
    %c0_27 = arith.constant 0 : index
    %c0_28 = arith.constant 0 : index
    %41 = vector.load %arg5[%c0_27, %c0_28] : memref<1x64xf32, #tpu.memory_space<vmem>>, vector<1x64xf32>
    %42 = vector.broadcast %41 : vector<1x64xf32> to vector<2x64xf32>
    %43 = arith.mulf %40, %42 : vector<2x64xf32>
    %cst_29 = arith.constant dense<0.000000e+00> : vector<2xf32>
    %44 = vector.multi_reduction <add>, %43, %cst_29 [1] : vector<2x64xf32> to vector<2xf32>
    %45 = vector.shape_cast %44 : vector<2xf32> to vector<2x1xf32>
    %c0_30 = arith.constant 0 : index
    %c0_31 = arith.constant 0 : index
    %46 = vector.load %arg6[%c0_30, %c0_31] : memref<1x1xf32, #tpu.memory_space<vmem>>, vector<1x1xf32>
    %47 = vector.broadcast %46 : vector<1x1xf32> to vector<2x1xf32>
    %48 = arith.addf %45, %47 : vector<2x1xf32>
    %c0_32 = arith.constant 0 : index
    %c0_33 = arith.constant 0 : index
    %49 = vector.load %arg7[%c0_32, %c0_33] : memref<2x1xf32, #tpu.memory_space<vmem>>, vector<2x1xf32>
    tpu.vector_store %arg7[%c0_32, %c0_33], %48 {strides = array<i32>} : memref<2x1xf32, #tpu.memory_space<vmem>>, vector<2x1xf32>,
    return
  }
  func.func @transform_0(%arg0: i32) -> (i32, i32) {
    %c0_i32 = arith.constant 0 : i32
    %c0_i32_0 = arith.constant 0 : i32
    %c0_i32_1 = arith.constant 0 : i32
    return %c0_i32, %c0_i32_0 : i32, i32
  }
  func.func @transform_1(%arg0: i32) -> (i32, i32) {
    %c0_i32 = arith.constant 0 : i32
    %c0_i32_0 = arith.constant 0 : i32
    %c0_i32_1 = arith.constant 0 : i32
    return %c0_i32, %c0_i32_0 : i32, i32
  }
  func.func @transform_2(%arg0: i32) -> (i32, i32) {
    %c0_i32 = arith.constant 0 : i32
    %c0_i32_0 = arith.constant 0 : i32
    %c0_i32_1 = arith.constant 0 : i32
    return %c0_i32, %c0_i32_0 : i32, i32
  }
  func.func @transform_3(%arg0: i32) -> (i32, i32) {
    %c0_i32 = arith.constant 0 : i32
    %c0_i32_0 = arith.constant 0 : i32
    %c0_i32_1 = arith.constant 0 : i32
    return %c0_i32, %c0_i32_0 : i32, i32
  }
  func.func @transform_4(%arg0: i32) -> (i32, i32) {
    %c0_i32 = arith.constant 0 : i32
    %c0_i32_0 = arith.constant 0 : i32
    %c0_i32_1 = arith.constant 0 : i32
    return %c0_i32, %c0_i32_0 : i32, i32
  }
  func.func @transform_5(%arg0: i32) -> (i32, i32) {
    %c0_i32 = arith.constant 0 : i32
    %c0_i32_0 = arith.constant 0 : i32
    %c0_i32_1 = arith.constant 0 : i32
    return %c0_i32, %c0_i32_0 : i32, i32
  }
  func.func @transform_6(%arg0: i32) -> (i32, i32) {
    %c0_i32 = arith.constant 0 : i32
    %c0_i32_0 = arith.constant 0 : i32
    %c0_i32_1 = arith.constant 0 : i32
    return %c0_i32, %c0_i32_0 : i32, i32
  }
}

</mosaic_0001>

<llo_original>
// kernel: simple_rnn_forward.1
$region0: #{simple_rnn_forward.1}
  #allocation0 [shape = 'u32[]', space=smem, size = 0x4, offset = 0x4, fixed_abs, tag = 'smem constant byte address 0x4 - core index']
  #allocation1 [shape = 'u32[144,128]{1,0:T(1,128)}', space=vmem, size = 0x12000, scoped, tag = 'internal scratch']
  #allocation2 [shape = 'f32[16,64]{1,0:T(8,128)}', space=vmem, size = 0x2000, scoped, tag = 'scratch operand']
  #allocation3 [shape = 'f32[1,1]{1,0:T(1,128)S(1)}', space=vmem, size = 0x200, scoped, tag = 'scoped memory for simple_rnn_forward.1']
  %s0 = inlined_call_operand.vmem [shape: f32[16,5], index: 0, kind: input, shape index: {}]
  %s1 = inlined_call_operand.vmem [shape: f32[5,64], index: 1, kind: input, shape index: {}]
  %s2 = inlined_call_operand.vmem [shape: f32[64,64], index: 2, kind: input, shape index: {}]
  %s3 = inlined_call_operand.vmem [shape: f32[1,64], index: 3, kind: input, shape index: {}]
  %s4 = inlined_call_operand.vmem [shape: f32[1,64], index: 4, kind: input, shape index: {}]
  %s5 = inlined_call_operand.<no memory space> [shape: f32[1,1], index: 5, kind: input, shape index: {}]
  %s6 = inlined_call_operand.vmem [shape: f32[2,1], index: 6, kind: output, shape index: {}]
  %s7 = sld [smem:[#allocation0]]
  $region34: #{simple_rnn_forward.1} parent=0
    _
  %s9 = ssub.s32 1, %s7
  %s10 = scalar_select 0, %s9, %s7
  %v11 = vstv %s5
  %12 = vst [vmem:[#allocation3] sm:$0x1] %v11
  // Predicated region
  $region2: #{simple_rnn_forward.1} parent=0 // pred_check
    _
  $region3: #{simple_rnn_forward.1} parent=0 // pred_check_branch
    %14 = sbr.rel (0) target = $region5
  $region4: #{simple_rnn_forward.1} parent=0 // pred_region
    _
  $region5: #{simple_rnn_forward.1} parent=0 // pred_fallthru
    _
  // Predicated region
  $region6: #{simple_rnn_forward.1} parent=0 // pred_check
    _
  $region7: #{simple_rnn_forward.1} parent=0 // pred_check_branch
    %16 = sbr.rel (0) target = $region9
  $region8: #{simple_rnn_forward.1} parent=0 // pred_region
    _
  $region9: #{simple_rnn_forward.1} parent=0 // pred_fallthru
    _
  // Predicated region
  $region10: #{simple_rnn_forward.1} parent=0 // pred_check
    _
  $region11: #{simple_rnn_forward.1} parent=0 // pred_check_branch
    %18 = sbr.rel (0) target = $region13
  $region12: #{simple_rnn_forward.1} parent=0 // pred_region
    _
  $region13: #{simple_rnn_forward.1} parent=0 // pred_fallthru
    _
  // Predicated region
  $region14: #{simple_rnn_forward.1} parent=0 // pred_check
    _
  $region15: #{simple_rnn_forward.1} parent=0 // pred_check_branch
    %20 = sbr.rel (0) target = $region17
  $region16: #{simple_rnn_forward.1} parent=0 // pred_region
    _
  $region17: #{simple_rnn_forward.1} parent=0 // pred_fallthru
    _
  // Predicated region
  $region18: #{simple_rnn_forward.1} parent=0 // pred_check
    _
  $region19: #{simple_rnn_forward.1} parent=0 // pred_check_branch
    %22 = sbr.rel (0) target = $region21
  $region20: #{simple_rnn_forward.1} parent=0 // pred_region
    _
  $region21: #{simple_rnn_forward.1} parent=0 // pred_fallthru
    _
  // Predicated region
  $region22: #{simple_rnn_forward.1} parent=0 // pred_check
    _
  $region23: #{simple_rnn_forward.1} parent=0 // pred_check_branch
    %24 = sbr.rel (0) target = $region25
  $region24: #{simple_rnn_forward.1} parent=0 // pred_region
    _
  $region25: #{simple_rnn_forward.1} parent=0 // pred_fallthru
    _
  %v25 = vld [vmem:[%s0] sm:$0xff]
  %v26 = vld [vmem:[%s0 + $0x8] sm:$0xff]
  %v27 = vld [vmem:[%s1] sm:$0x1f]
  %v28 = vld [vmem:[%s3] sm:$0x1]
  %v30 = vlaneseq
  %v31 = vshrl.u32 %v30, 7
  %v32 = vsub.s32 0, %v31
  %v33 = vrot.slane %v28, %v32
  %vm35 = vcmask 39936
  %v37 = vsel %vm35, %v25, 0
  %v40 = vsel %vm35, %v26, 0
  %vm42 = vcmask 1044480
  %v44 = vsel %vm42, %v27, 0
  %46 = vmatprep.subr.mxu0 0.0
  %47 = vmatpush1.msra.mxu0 0.0
  %48 = vmatprep.subr.mxu0 0.0
  %49 = vmatpush1.msra.mxu0 0.0
  %50 = vmatprep.subr.mxu0 0.0
  %51 = vmatpush1.msra.mxu0 0.0
  %52 = vmatprep.subr.mxu0 0.0
  %53 = vmatpush1.msra.mxu0 0.0
  %54 = vmatprep.subr.mxu0 0.0
  %55 = vmatpush1.msra.mxu0 0.0
  %56 = vmatprep.subr.mxu0 0.0
  %57 = vmatpush1.msra.mxu0 0.0
  %58 = vmatprep.subr.mxu0 0.0
  %59 = vmatpush1.msra.mxu0 0.0
  %60 = vmatprep.subr.mxu0 0.0
  %61 = vmatpush1.msra.mxu0 0.0
  %62 = vmatprep.subr.mxu0 0.0
  %63 = vmatpush1.msra.mxu0 0.0
  %64 = vmatprep.subr.mxu0 0.0
  %65 = vmatpush1.msra.mxu0 0.0
  %66 = vmatprep.subr.mxu0 0.0
  %67 = vmatpush1.msra.mxu0 0.0
  %68 = vmatprep.subr.mxu0 0.0
  %69 = vmatpush1.msra.mxu0 0.0
  %70 = vmatprep.subr.mxu0 0.0
  %71 = vmatpush1.msra.mxu0 0.0
  %72 = vmatprep.subr.mxu0 0.0
  %73 = vmatpush1.msra.mxu0 0.0
  %74 = vmatprep.subr.mxu0 0.0
  %75 = vmatpush1.msra.mxu0 0.0
  %76 = vmatprep.subr.mxu0 0.0
  %77 = vmatpush1.msra.mxu0 %v44
  %78 = vmatprep.subr.mxu0 0.0
  %79 = vmatpush2.msra.mxu0 0.0
  %80 = vmatprep.subr.mxu0 0.0
  %81 = vmatpush2.msra.mxu0 0.0
  %82 = vmatprep.subr.mxu0 0.0
  %83 = vmatpush2.msra.mxu0 0.0
  %84 = vmatprep.subr.mxu0 0.0
  %85 = vmatpush2.msra.mxu0 0.0
  %86 = vmatprep.subr.mxu0 0.0
  %87 = vmatpush2.msra.mxu0 0.0
  %88 = vmatprep.subr.mxu0 0.0
  %89 = vmatpush2.msra.mxu0 0.0
  %90 = vmatprep.subr.mxu0 0.0
  %91 = vmatpush2.msra.mxu0 0.0
  %92 = vmatprep.subr.mxu0 0.0
  %93 = vmatpush2.msra.mxu0 0.0
  %94 = vmatprep.subr.mxu0 0.0
  %95 = vmatpush2.msra.mxu0 0.0
  %96 = vmatprep.subr.mxu0 0.0
  %97 = vmatpush2.msra.mxu0 0.0
  %98 = vmatprep.subr.mxu0 0.0
  %99 = vmatpush2.msra.mxu0 0.0
  %100 = vmatprep.subr.mxu0 0.0
  %101 = vmatpush2.msra.mxu0 0.0
  %102 = vmatprep.subr.mxu0 0.0
  %103 = vmatpush2.msra.mxu0 0.0
  %104 = vmatprep.subr.mxu0 0.0
  %105 = vmatpush2.msra.mxu0 0.0
  %106 = vmatprep.subr.mxu0 0.0
  %107 = vmatpush2.msra.mxu0 0.0
  %108 = vmatprep.subr.mxu0 0.0
  %109 = vmatpush2.msra.mxu0 0.0
  %110 = vmatprep.mubr.f32.mxu0 0.0
  %111 = vmatmul.mubr.f32.gmra.mxu0 %v37
  %v112 = vpop.f32.mrf.mxu0
  %v113 = vadd.f32 %v33, %v112
  %v114 = vpop.f32.mrf.mxu0
  %115 = vmatprep.mubr.f32.mxu0 0.0
  %116 = vmatmul.mubr.f32.gmra.mxu0 %v40
  %v117 = vpop.f32.mrf.mxu0
  %v118 = vadd.f32 %v33, %v117
  %v119 = vpop.f32.mrf.mxu0
  %120 = vdwg.mxu0
  %vm121 = vcmask 523264
  %122 = vst.msk [vmem:[#allocation2] sm:$0xff] %vm121, %v113
  %123 = vst.msk [vmem:[#allocation2 + $0x8] sm:$0xff] %vm121, %v118
  %v124 = vld [vmem:[%s2] sm:$0xff]
  %v125 = vld [vmem:[%s2 + $0x8] sm:$0xff]
  %v126 = vld [vmem:[%s2 + $0x10] sm:$0xff]
  %v127 = vld [vmem:[%s2 + $0x18] sm:$0xff]
  %v128 = vld [vmem:[%s2 + $0x20] sm:$0xff]
  %v129 = vld [vmem:[%s2 + $0x28] sm:$0xff]
  %v130 = vld [vmem:[%s2 + $0x30] sm:$0xff]
  %v131 = vld [vmem:[%s2 + $0x38] sm:$0xff]
  %v132 = vld [vmem:[#allocation2] sm:$0x3]
  %v134 = vsel %vm121, 0.0, 0
  %136 = vmatprep.subr.mxu0 0.0
  %137 = vmatpush1.msra.mxu0 0.0
  %138 = vmatprep.subr.mxu0 0.0
  %139 = vmatpush1.msra.mxu0 0.0
  %140 = vmatprep.subr.mxu0 0.0
  %141 = vmatpush1.msra.mxu0 0.0
  %142 = vmatprep.subr.mxu0 0.0
  %143 = vmatpush1.msra.mxu0 0.0
  %144 = vmatprep.subr.mxu0 0.0
  %145 = vmatpush1.msra.mxu0 0.0
  %146 = vmatprep.subr.mxu0 0.0
  %147 = vmatpush1.msra.mxu0 0.0
  %148 = vmatprep.subr.mxu0 0.0
  %149 = vmatpush1.msra.mxu0 0.0
  %150 = vmatprep.subr.mxu0 0.0
  %151 = vmatpush1.msra.mxu0 0.0
  %152 = vmatprep.subr.mxu0 0.0
  %153 = vmatpush1.msra.mxu0 %v131
  %154 = vmatprep.subr.mxu0 0.0
  %155 = vmatpush1.msra.mxu0 %v130
  %156 = vmatprep.subr.mxu0 0.0
  %157 = vmatpush1.msra.mxu0 %v129
  %158 = vmatprep.subr.mxu0 0.0
  %159 = vmatpush1.msra.mxu0 %v128
  %160 = vmatprep.subr.mxu0 0.0
  %161 = vmatpush1.msra.mxu0 %v127
  %162 = vmatprep.subr.mxu0 0.0
  %163 = vmatpush1.msra.mxu0 %v126
  %164 = vmatprep.subr.mxu0 0.0
  %165 = vmatpush1.msra.mxu0 %v125
  %166 = vmatprep.subr.mxu0 0.0
  %167 = vmatpush1.msra.mxu0 %v124
  %168 = vmatprep.subr.mxu0 0.0
  %169 = vmatpush2.msra.mxu0 0.0
  %170 = vmatprep.subr.mxu0 0.0
  %171 = vmatpush2.msra.mxu0 0.0
  %172 = vmatprep.subr.mxu0 0.0
  %173 = vmatpush2.msra.mxu0 0.0
  %174 = vmatprep.subr.mxu0 0.0
  %175 = vmatpush2.msra.mxu0 0.0
  %176 = vmatprep.subr.mxu0 0.0
  %177 = vmatpush2.msra.mxu0 0.0
  %178 = vmatprep.subr.mxu0 0.0
  %179 = vmatpush2.msra.mxu0 0.0
  %180 = vmatprep.subr.mxu0 0.0
  %181 = vmatpush2.msra.mxu0 0.0
  %182 = vmatprep.subr.mxu0 0.0
  %183 = vmatpush2.msra.mxu0 0.0
  %184 = vmatprep.subr.mxu0 0.0
  %185 = vmatpush2.msra.mxu0 0.0
  %186 = vmatprep.subr.mxu0 0.0
  %187 = vmatpush2.msra.mxu0 0.0
  %188 = vmatprep.subr.mxu0 0.0
  %189 = vmatpush2.msra.mxu0 0.0
  %190 = vmatprep.subr.mxu0 0.0
  %191 = vmatpush2.msra.mxu0 0.0
  %192 = vmatprep.subr.mxu0 0.0
  %193 = vmatpush2.msra.mxu0 0.0
  %194 = vmatprep.subr.mxu0 0.0
  %195 = vmatpush2.msra.mxu0 0.0
  %196 = vmatprep.subr.mxu0 0.0
  %197 = vmatpush2.msra.mxu0 0.0
  %198 = vmatprep.subr.mxu0 0.0
  %199 = vmatpush2.msra.mxu0 0.0
  %200 = vmatprep.mubr.f32.mxu0 0.0
  %201 = vmatmul.mubr.f32.gmra.mxu0 %v134
  %v202 = vpop.f32.mrf.mxu0
  %v203 = vadd.f32 0.0, %v202
  %v204 = vpop.f32.mrf.mxu0
  %205 = vdwg.mxu0
  %v206 = vadd.f32 %v132, %v203
  %v207 = vtanh.pop %v206
  %v208 = vld [vmem:[#allocation2 + $0x2] sm:$0x3]
  %v210 = vsel %vm121, %v207, 0
  %212 = vmatprep.subr.mxu0 0.0
  %213 = vmatpush1.msra.mxu0 0.0
  %214 = vmatprep.subr.mxu0 0.0
  %215 = vmatpush1.msra.mxu0 0.0
  %216 = vmatprep.subr.mxu0 0.0
  %217 = vmatpush1.msra.mxu0 0.0
  %218 = vmatprep.subr.mxu0 0.0
  %219 = vmatpush1.msra.mxu0 0.0
  %220 = vmatprep.subr.mxu0 0.0
  %221 = vmatpush1.msra.mxu0 0.0
  %222 = vmatprep.subr.mxu0 0.0
  %223 = vmatpush1.msra.mxu0 0.0
  %224 = vmatprep.subr.mxu0 0.0
  %225 = vmatpush1.msra.mxu0 0.0
  %226 = vmatprep.subr.mxu0 0.0
  %227 = vmatpush1.msra.mxu0 0.0
  %228 = vmatprep.subr.mxu0 0.0
  %229 = vmatpush1.msra.mxu0 %v131
  %230 = vmatprep.subr.mxu0 0.0
  %231 = vmatpush1.msra.mxu0 %v130
  %232 = vmatprep.subr.mxu0 0.0
  %233 = vmatpush1.msra.mxu0 %v129
  %234 = vmatprep.subr.mxu0 0.0
  %235 = vmatpush1.msra.mxu0 %v128
  %236 = vmatprep.subr.mxu0 0.0
  %237 = vmatpush1.msra.mxu0 %v127
  %238 = vmatprep.subr.mxu0 0.0
  %239 = vmatpush1.msra.mxu0 %v126
  %240 = vmatprep.subr.mxu0 0.0
  %241 = vmatpush1.msra.mxu0 %v125
  %242 = vmatprep.subr.mxu0 0.0
  %243 = vmatpush1.msra.mxu0 %v124
  %244 = vmatprep.subr.mxu0 0.0
  %245 = vmatpush2.msra.mxu0 0.0
  %246 = vmatprep.subr.mxu0 0.0
  %247 = vmatpush2.msra.mxu0 0.0
  %248 = vmatprep.subr.mxu0 0.0
  %249 = vmatpush2.msra.mxu0 0.0
  %250 = vmatprep.subr.mxu0 0.0
  %251 = vmatpush2.msra.mxu0 0.0
  %252 = vmatprep.subr.mxu0 0.0
  %253 = vmatpush2.msra.mxu0 0.0
  %254 = vmatprep.subr.mxu0 0.0
  %255 = vmatpush2.msra.mxu0 0.0
  %256 = vmatprep.subr.mxu0 0.0
  %257 = vmatpush2.msra.mxu0 0.0
  %258 = vmatprep.subr.mxu0 0.0
  %259 = vmatpush2.msra.mxu0 0.0
  %260 = vmatprep.subr.mxu0 0.0
  %261 = vmatpush2.msra.mxu0 0.0
  %262 = vmatprep.subr.mxu0 0.0
  %263 = vmatpush2.msra.mxu0 0.0
  %264 = vmatprep.subr.mxu0 0.0
  %265 = vmatpush2.msra.mxu0 0.0
  %266 = vmatprep.subr.mxu0 0.0
  %267 = vmatpush2.msra.mxu0 0.0
  %268 = vmatprep.subr.mxu0 0.0
  %269 = vmatpush2.msra.mxu0 0.0
  %270 = vmatprep.subr.mxu0 0.0
  %271 = vmatpush2.msra.mxu0 0.0
  %272 = vmatprep.subr.mxu0 0.0
  %273 = vmatpush2.msra.mxu0 0.0
  %274 = vmatprep.subr.mxu0 0.0
  %275 = vmatpush2.msra.mxu0 0.0
  %276 = vmatprep.mubr.f32.mxu0 0.0
  %277 = vmatmul.mubr.f32.gmra.mxu0 %v210
  %v278 = vpop.f32.mrf.mxu0
  %v279 = vadd.f32 0.0, %v278
  %v280 = vpop.f32.mrf.mxu0
  %281 = vdwg.mxu0
  %v282 = vadd.f32 %v208, %v279
  %v283 = vtanh.pop %v282
  %v284 = vld [vmem:[#allocation2 + $0x4] sm:$0x3]
  %v286 = vsel %vm121, %v283, 0
  %288 = vmatprep.subr.mxu0 0.0
  %289 = vmatpush1.msra.mxu0 0.0
  %290 = vmatprep.subr.mxu0 0.0
  %291 = vmatpush1.msra.mxu0 0.0
  %292 = vmatprep.subr.mxu0 0.0
  %293 = vmatpush1.msra.mxu0 0.0
  %294 = vmatprep.subr.mxu0 0.0
  %295 = vmatpush1.msra.mxu0 0.0
  %296 = vmatprep.subr.mxu0 0.0
  %297 = vmatpush1.msra.mxu0 0.0
  %298 = vmatprep.subr.mxu0 0.0
  %299 = vmatpush1.msra.mxu0 0.0
  %300 = vmatprep.subr.mxu0 0.0
  %301 = vmatpush1.msra.mxu0 0.0
  %302 = vmatprep.subr.mxu0 0.0
  %303 = vmatpush1.msra.mxu0 0.0
  %304 = vmatprep.subr.mxu0 0.0
  %305 = vmatpush1.msra.mxu0 %v131
  %306 = vmatprep.subr.mxu0 0.0
  %307 = vmatpush1.msra.mxu0 %v130
  %308 = vmatprep.subr.mxu0 0.0
  %309 = vmatpush1.msra.mxu0 %v129
  %310 = vmatprep.subr.mxu0 0.0
  %311 = vmatpush1.msra.mxu0 %v128
  %312 = vmatprep.subr.mxu0 0.0
  %313 = vmatpush1.msra.mxu0 %v127
  %314 = vmatprep.subr.mxu0 0.0
  %315 = vmatpush1.msra.mxu0 %v126
  %316 = vmatprep.subr.mxu0 0.0
  %317 = vmatpush1.msra.mxu0 %v125
  %318 = vmatprep.subr.mxu0 0.0
  %319 = vmatpush1.msra.mxu0 %v124
  %320 = vmatprep.subr.mxu0 0.0
  %321 = vmatpush2.msra.mxu0 0.0
  %322 = vmatprep.subr.mxu0 0.0
  %323 = vmatpush2.msra.mxu0 0.0
  %324 = vmatprep.subr.mxu0 0.0
  %325 = vmatpush2.msra.mxu0 0.0
  %326 = vmatprep.subr.mxu0 0.0
  %327 = vmatpush2.msra.mxu0 0.0
  %328 = vmatprep.subr.mxu0 0.0
  %329 = vmatpush2.msra.mxu0 0.0
  %330 = vmatprep.subr.mxu0 0.0
  %331 = vmatpush2.msra.mxu0 0.0
  %332 = vmatprep.subr.mxu0 0.0
  %333 = vmatpush2.msra.mxu0 0.0
  %334 = vmatprep.subr.mxu0 0.0
  %335 = vmatpush2.msra.mxu0 0.0
  %336 = vmatprep.subr.mxu0 0.0
  %337 = vmatpush2.msra.mxu0 0.0
  %338 = vmatprep.subr.mxu0 0.0
  %339 = vmatpush2.msra.mxu0 0.0
  %340 = vmatprep.subr.mxu0 0.0
  %341 = vmatpush2.msra.mxu0 0.0
  %342 = vmatprep.subr.mxu0 0.0
  %343 = vmatpush2.msra.mxu0 0.0
  %344 = vmatprep.subr.mxu0 0.0
  %345 = vmatpush2.msra.mxu0 0.0
  %346 = vmatprep.subr.mxu0 0.0
  %347 = vmatpush2.msra.mxu0 0.0
  %348 = vmatprep.subr.mxu0 0.0
  %349 = vmatpush2.msra.mxu0 0.0
  %350 = vmatprep.subr.mxu0 0.0
  %351 = vmatpush2.msra.mxu0 0.0
  %352 = vmatprep.mubr.f32.mxu0 0.0
  %353 = vmatmul.mubr.f32.gmra.mxu0 %v286
  %v354 = vpop.f32.mrf.mxu0
  %v355 = vadd.f32 0.0, %v354
  %v356 = vpop.f32.mrf.mxu0
  %357 = vdwg.mxu0
  %v358 = vadd.f32 %v284, %v355
  %v359 = vtanh.pop %v358
  %v360 = vld [vmem:[#allocation2 + $0x6] sm:$0x3]
  %v362 = vsel %vm121, %v359, 0
  %364 = vmatprep.subr.mxu0 0.0
  %365 = vmatpush1.msra.mxu0 0.0
  %366 = vmatprep.subr.mxu0 0.0
  %367 = vmatpush1.msra.mxu0 0.0
  %368 = vmatprep.subr.mxu0 0.0
  %369 = vmatpush1.msra.mxu0 0.0
  %370 = vmatprep.subr.mxu0 0.0
  %371 = vmatpush1.msra.mxu0 0.0
  %372 = vmatprep.subr.mxu0 0.0
  %373 = vmatpush1.msra.mxu0 0.0
  %374 = vmatprep.subr.mxu0 0.0
  %375 = vmatpush1.msra.mxu0 0.0
  %376 = vmatprep.subr.mxu0 0.0
  %377 = vmatpush1.msra.mxu0 0.0
  %378 = vmatprep.subr.mxu0 0.0
  %379 = vmatpush1.msra.mxu0 0.0
  %380 = vmatprep.subr.mxu0 0.0
  %381 = vmatpush1.msra.mxu0 %v131
  %382 = vmatprep.subr.mxu0 0.0
  %383 = vmatpush1.msra.mxu0 %v130
  %384 = vmatprep.subr.mxu0 0.0
  %385 = vmatpush1.msra.mxu0 %v129
  %386 = vmatprep.subr.mxu0 0.0
  %387 = vmatpush1.msra.mxu0 %v128
  %388 = vmatprep.subr.mxu0 0.0
  %389 = vmatpush1.msra.mxu0 %v127
  %390 = vmatprep.subr.mxu0 0.0
  %391 = vmatpush1.msra.mxu0 %v126
  %392 = vmatprep.subr.mxu0 0.0
  %393 = vmatpush1.msra.mxu0 %v125
  %394 = vmatprep.subr.mxu0 0.0
  %395 = vmatpush1.msra.mxu0 %v124
  %396 = vmatprep.subr.mxu0 0.0
  %397 = vmatpush2.msra.mxu0 0.0
  %398 = vmatprep.subr.mxu0 0.0
  %399 = vmatpush2.msra.mxu0 0.0
  %400 = vmatprep.subr.mxu0 0.0
  %401 = vmatpush2.msra.mxu0 0.0
  %402 = vmatprep.subr.mxu0 0.0
  %403 = vmatpush2.msra.mxu0 0.0
  %404 = vmatprep.subr.mxu0 0.0
  %405 = vmatpush2.msra.mxu0 0.0
  %406 = vmatprep.subr.mxu0 0.0
  %407 = vmatpush2.msra.mxu0 0.0
  %408 = vmatprep.subr.mxu0 0.0
  %409 = vmatpush2.msra.mxu0 0.0
  %410 = vmatprep.subr.mxu0 0.0
  %411 = vmatpush2.msra.mxu0 0.0
  %412 = vmatprep.subr.mxu0 0.0
  %413 = vmatpush2.msra.mxu0 0.0
  %414 = vmatprep.subr.mxu0 0.0
  %415 = vmatpush2.msra.mxu0 0.0
  %416 = vmatprep.subr.mxu0 0.0
  %417 = vmatpush2.msra.mxu0 0.0
  %418 = vmatprep.subr.mxu0 0.0
  %419 = vmatpush2.msra.mxu0 0.0
  %420 = vmatprep.subr.mxu0 0.0
  %421 = vmatpush2.msra.mxu0 0.0
  %422 = vmatprep.subr.mxu0 0.0
  %423 = vmatpush2.msra.mxu0 0.0
  %424 = vmatprep.subr.mxu0 0.0
  %425 = vmatpush2.msra.mxu0 0.0
  %426 = vmatprep.subr.mxu0 0.0
  %427 = vmatpush2.msra.mxu0 0.0
  %428 = vmatprep.mubr.f32.mxu0 0.0
  %429 = vmatmul.mubr.f32.gmra.mxu0 %v362
  %v430 = vpop.f32.mrf.mxu0
  %v431 = vadd.f32 0.0, %v430
  %v432 = vpop.f32.mrf.mxu0
  %433 = vdwg.mxu0
  %v434 = vadd.f32 %v360, %v431
  %v435 = vtanh.pop %v434
  %v436 = vld [vmem:[#allocation2 + $0x8] sm:$0x3]
  %v438 = vsel %vm121, %v435, 0
  %440 = vmatprep.subr.mxu0 0.0
  %441 = vmatpush1.msra.mxu0 0.0
  %442 = vmatprep.subr.mxu0 0.0
  %443 = vmatpush1.msra.mxu0 0.0
  %444 = vmatprep.subr.mxu0 0.0
  %445 = vmatpush1.msra.mxu0 0.0
  %446 = vmatprep.subr.mxu0 0.0
  %447 = vmatpush1.msra.mxu0 0.0
  %448 = vmatprep.subr.mxu0 0.0
  %449 = vmatpush1.msra.mxu0 0.0
  %450 = vmatprep.subr.mxu0 0.0
  %451 = vmatpush1.msra.mxu0 0.0
  %452 = vmatprep.subr.mxu0 0.0
  %453 = vmatpush1.msra.mxu0 0.0
  %454 = vmatprep.subr.mxu0 0.0
  %455 = vmatpush1.msra.mxu0 0.0
  %456 = vmatprep.subr.mxu0 0.0
  %457 = vmatpush1.msra.mxu0 %v131
  %458 = vmatprep.subr.mxu0 0.0
  %459 = vmatpush1.msra.mxu0 %v130
  %460 = vmatprep.subr.mxu0 0.0
  %461 = vmatpush1.msra.mxu0 %v129
  %462 = vmatprep.subr.mxu0 0.0
  %463 = vmatpush1.msra.mxu0 %v128
  %464 = vmatprep.subr.mxu0 0.0
  %465 = vmatpush1.msra.mxu0 %v127
  %466 = vmatprep.subr.mxu0 0.0
  %467 = vmatpush1.msra.mxu0 %v126
  %468 = vmatprep.subr.mxu0 0.0
  %469 = vmatpush1.msra.mxu0 %v125
  %470 = vmatprep.subr.mxu0 0.0
  %471 = vmatpush1.msra.mxu0 %v124
  %472 = vmatprep.subr.mxu0 0.0
  %473 = vmatpush2.msra.mxu0 0.0
  %474 = vmatprep.subr.mxu0 0.0
  %475 = vmatpush2.msra.mxu0 0.0
  %476 = vmatprep.subr.mxu0 0.0
  %477 = vmatpush2.msra.mxu0 0.0
  %478 = vmatprep.subr.mxu0 0.0
  %479 = vmatpush2.msra.mxu0 0.0
  %480 = vmatprep.subr.mxu0 0.0
  %481 = vmatpush2.msra.mxu0 0.0
  %482 = vmatprep.subr.mxu0 0.0
  %483 = vmatpush2.msra.mxu0 0.0
  %484 = vmatprep.subr.mxu0 0.0
  %485 = vmatpush2.msra.mxu0 0.0
  %486 = vmatprep.subr.mxu0 0.0
  %487 = vmatpush2.msra.mxu0 0.0
  %488 = vmatprep.subr.mxu0 0.0
  %489 = vmatpush2.msra.mxu0 0.0
  %490 = vmatprep.subr.mxu0 0.0
  %491 = vmatpush2.msra.mxu0 0.0
  %492 = vmatprep.subr.mxu0 0.0
  %493 = vmatpush2.msra.mxu0 0.0
  %494 = vmatprep.subr.mxu0 0.0
  %495 = vmatpush2.msra.mxu0 0.0
  %496 = vmatprep.subr.mxu0 0.0
  %497 = vmatpush2.msra.mxu0 0.0
  %498 = vmatprep.subr.mxu0 0.0
  %499 = vmatpush2.msra.mxu0 0.0
  %500 = vmatprep.subr.mxu0 0.0
  %501 = vmatpush2.msra.mxu0 0.0
  %502 = vmatprep.subr.mxu0 0.0
  %503 = vmatpush2.msra.mxu0 0.0
  %504 = vmatprep.mubr.f32.mxu0 0.0
  %505 = vmatmul.mubr.f32.gmra.mxu0 %v438
  %v506 = vpop.f32.mrf.mxu0
  %v507 = vadd.f32 0.0, %v506
  %v508 = vpop.f32.mrf.mxu0
  %509 = vdwg.mxu0
  %v510 = vadd.f32 %v436, %v507
  %v511 = vtanh.pop %v510
  %v512 = vld [vmem:[#allocation2 + $0xa] sm:$0x3]
  %v514 = vsel %vm121, %v511, 0
  %516 = vmatprep.subr.mxu0 0.0
  %517 = vmatpush1.msra.mxu0 0.0
  %518 = vmatprep.subr.mxu0 0.0
  %519 = vmatpush1.msra.mxu0 0.0
  %520 = vmatprep.subr.mxu0 0.0
  %521 = vmatpush1.msra.mxu0 0.0
  %522 = vmatprep.subr.mxu0 0.0
  %523 = vmatpush1.msra.mxu0 0.0
  %524 = vmatprep.subr.mxu0 0.0
  %525 = vmatpush1.msra.mxu0 0.0
  %526 = vmatprep.subr.mxu0 0.0
  %527 = vmatpush1.msra.mxu0 0.0
  %528 = vmatprep.subr.mxu0 0.0
  %529 = vmatpush1.msra.mxu0 0.0
  %530 = vmatprep.subr.mxu0 0.0
  %531 = vmatpush1.msra.mxu0 0.0
  %532 = vmatprep.subr.mxu0 0.0
  %533 = vmatpush1.msra.mxu0 %v131
  %534 = vmatprep.subr.mxu0 0.0
  %535 = vmatpush1.msra.mxu0 %v130
  %536 = vmatprep.subr.mxu0 0.0
  %537 = vmatpush1.msra.mxu0 %v129
  %538 = vmatprep.subr.mxu0 0.0
  %539 = vmatpush1.msra.mxu0 %v128
  %540 = vmatprep.subr.mxu0 0.0
  %541 = vmatpush1.msra.mxu0 %v127
  %542 = vmatprep.subr.mxu0 0.0
  %543 = vmatpush1.msra.mxu0 %v126
  %544 = vmatprep.subr.mxu0 0.0
  %545 = vmatpush1.msra.mxu0 %v125
  %546 = vmatprep.subr.mxu0 0.0
  %547 = vmatpush1.msra.mxu0 %v124
  %548 = vmatprep.subr.mxu0 0.0
  %549 = vmatpush2.msra.mxu0 0.0
  %550 = vmatprep.subr.mxu0 0.0
  %551 = vmatpush2.msra.mxu0 0.0
  %552 = vmatprep.subr.mxu0 0.0
  %553 = vmatpush2.msra.mxu0 0.0
  %554 = vmatprep.subr.mxu0 0.0
  %555 = vmatpush2.msra.mxu0 0.0
  %556 = vmatprep.subr.mxu0 0.0
  %557 = vmatpush2.msra.mxu0 0.0
  %558 = vmatprep.subr.mxu0 0.0
  %559 = vmatpush2.msra.mxu0 0.0
  %560 = vmatprep.subr.mxu0 0.0
  %561 = vmatpush2.msra.mxu0 0.0
  %562 = vmatprep.subr.mxu0 0.0
  %563 = vmatpush2.msra.mxu0 0.0
  %564 = vmatprep.subr.mxu0 0.0
  %565 = vmatpush2.msra.mxu0 0.0
  %566 = vmatprep.subr.mxu0 0.0
  %567 = vmatpush2.msra.mxu0 0.0
  %568 = vmatprep.subr.mxu0 0.0
  %569 = vmatpush2.msra.mxu0 0.0
  %570 = vmatprep.subr.mxu0 0.0
  %571 = vmatpush2.msra.mxu0 0.0
  %572 = vmatprep.subr.mxu0 0.0
  %573 = vmatpush2.msra.mxu0 0.0
  %574 = vmatprep.subr.mxu0 0.0
  %575 = vmatpush2.msra.mxu0 0.0
  %576 = vmatprep.subr.mxu0 0.0
  %577 = vmatpush2.msra.mxu0 0.0
  %578 = vmatprep.subr.mxu0 0.0
  %579 = vmatpush2.msra.mxu0 0.0
  %580 = vmatprep.mubr.f32.mxu0 0.0
  %581 = vmatmul.mubr.f32.gmra.mxu0 %v514
  %v582 = vpop.f32.mrf.mxu0
  %v583 = vadd.f32 0.0, %v582
  %v584 = vpop.f32.mrf.mxu0
  %585 = vdwg.mxu0
  %v586 = vadd.f32 %v512, %v583
  %v587 = vtanh.pop %v586
  %v588 = vld [vmem:[#allocation2 + $0xc] sm:$0x3]
  %v590 = vsel %vm121, %v587, 0
  %592 = vmatprep.subr.mxu0 0.0
  %593 = vmatpush1.msra.mxu0 0.0
  %594 = vmatprep.subr.mxu0 0.0
  %595 = vmatpush1.msra.mxu0 0.0
  %596 = vmatprep.subr.mxu0 0.0
  %597 = vmatpush1.msra.mxu0 0.0
  %598 = vmatprep.subr.mxu0 0.0
  %599 = vmatpush1.msra.mxu0 0.0
  %600 = vmatprep.subr.mxu0 0.0
  %601 = vmatpush1.msra.mxu0 0.0
  %602 = vmatprep.subr.mxu0 0.0
  %603 = vmatpush1.msra.mxu0 0.0
  %604 = vmatprep.subr.mxu0 0.0
  %605 = vmatpush1.msra.mxu0 0.0
  %606 = vmatprep.subr.mxu0 0.0
  %607 = vmatpush1.msra.mxu0 0.0
  %608 = vmatprep.subr.mxu0 0.0
  %609 = vmatpush1.msra.mxu0 %v131
  %610 = vmatprep.subr.mxu0 0.0
  %611 = vmatpush1.msra.mxu0 %v130
  %612 = vmatprep.subr.mxu0 0.0
  %613 = vmatpush1.msra.mxu0 %v129
  %614 = vmatprep.subr.mxu0 0.0
  %615 = vmatpush1.msra.mxu0 %v128
  %616 = vmatprep.subr.mxu0 0.0
  %617 = vmatpush1.msra.mxu0 %v127
  %618 = vmatprep.subr.mxu0 0.0
  %619 = vmatpush1.msra.mxu0 %v126
  %620 = vmatprep.subr.mxu0 0.0
  %621 = vmatpush1.msra.mxu0 %v125
  %622 = vmatprep.subr.mxu0 0.0
  %623 = vmatpush1.msra.mxu0 %v124
  %624 = vmatprep.subr.mxu0 0.0
  %625 = vmatpush2.msra.mxu0 0.0
  %626 = vmatprep.subr.mxu0 0.0
  %627 = vmatpush2.msra.mxu0 0.0
  %628 = vmatprep.subr.mxu0 0.0
  %629 = vmatpush2.msra.mxu0 0.0
  %630 = vmatprep.subr.mxu0 0.0
  %631 = vmatpush2.msra.mxu0 0.0
  %632 = vmatprep.subr.mxu0 0.0
  %633 = vmatpush2.msra.mxu0 0.0
  %634 = vmatprep.subr.mxu0 0.0
  %635 = vmatpush2.msra.mxu0 0.0
  %636 = vmatprep.subr.mxu0 0.0
  %637 = vmatpush2.msra.mxu0 0.0
  %638 = vmatprep.subr.mxu0 0.0
  %639 = vmatpush2.msra.mxu0 0.0
  %640 = vmatprep.subr.mxu0 0.0
  %641 = vmatpush2.msra.mxu0 0.0
  %642 = vmatprep.subr.mxu0 0.0
  %643 = vmatpush2.msra.mxu0 0.0
  %644 = vmatprep.subr.mxu0 0.0
  %645 = vmatpush2.msra.mxu0 0.0
  %646 = vmatprep.subr.mxu0 0.0
  %647 = vmatpush2.msra.mxu0 0.0
  %648 = vmatprep.subr.mxu0 0.0
  %649 = vmatpush2.msra.mxu0 0.0
  %650 = vmatprep.subr.mxu0 0.0
  %651 = vmatpush2.msra.mxu0 0.0
  %652 = vmatprep.subr.mxu0 0.0
  %653 = vmatpush2.msra.mxu0 0.0
  %654 = vmatprep.subr.mxu0 0.0
  %655 = vmatpush2.msra.mxu0 0.0
  %656 = vmatprep.mubr.f32.mxu0 0.0
  %657 = vmatmul.mubr.f32.gmra.mxu0 %v590
  %v658 = vpop.f32.mrf.mxu0
  %v659 = vadd.f32 0.0, %v658
  %v660 = vpop.f32.mrf.mxu0
  %661 = vdwg.mxu0
  %v662 = vadd.f32 %v588, %v659
  %v663 = vtanh.pop %v662
  %v664 = vld [vmem:[#allocation2 + $0xe] sm:$0x3]
  %v666 = vsel %vm121, %v663, 0
  %668 = vmatprep.subr.mxu0 0.0
  %669 = vmatpush1.msra.mxu0 0.0
  %670 = vmatprep.subr.mxu0 0.0
  %671 = vmatpush1.msra.mxu0 0.0
  %672 = vmatprep.subr.mxu0 0.0
  %673 = vmatpush1.msra.mxu0 0.0
  %674 = vmatprep.subr.mxu0 0.0
  %675 = vmatpush1.msra.mxu0 0.0
  %676 = vmatprep.subr.mxu0 0.0
  %677 = vmatpush1.msra.mxu0 0.0
  %678 = vmatprep.subr.mxu0 0.0
  %679 = vmatpush1.msra.mxu0 0.0
  %680 = vmatprep.subr.mxu0 0.0
  %681 = vmatpush1.msra.mxu0 0.0
  %682 = vmatprep.subr.mxu0 0.0
  %683 = vmatpush1.msra.mxu0 0.0
  %684 = vmatprep.subr.mxu0 0.0
  %685 = vmatpush1.msra.mxu0 %v131
  %686 = vmatprep.subr.mxu0 0.0
  %687 = vmatpush1.msra.mxu0 %v130
  %688 = vmatprep.subr.mxu0 0.0
  %689 = vmatpush1.msra.mxu0 %v129
  %690 = vmatprep.subr.mxu0 0.0
  %691 = vmatpush1.msra.mxu0 %v128
  %692 = vmatprep.subr.mxu0 0.0
  %693 = vmatpush1.msra.mxu0 %v127
  %694 = vmatprep.subr.mxu0 0.0
  %695 = vmatpush1.msra.mxu0 %v126
  %696 = vmatprep.subr.mxu0 0.0
  %697 = vmatpush1.msra.mxu0 %v125
  %698 = vmatprep.subr.mxu0 0.0
  %699 = vmatpush1.msra.mxu0 %v124
  %700 = vmatprep.subr.mxu0 0.0
  %701 = vmatpush2.msra.mxu0 0.0
  %702 = vmatprep.subr.mxu0 0.0
  %703 = vmatpush2.msra.mxu0 0.0
  %704 = vmatprep.subr.mxu0 0.0
  %705 = vmatpush2.msra.mxu0 0.0
  %706 = vmatprep.subr.mxu0 0.0
  %707 = vmatpush2.msra.mxu0 0.0
  %708 = vmatprep.subr.mxu0 0.0
  %709 = vmatpush2.msra.mxu0 0.0
  %710 = vmatprep.subr.mxu0 0.0
  %711 = vmatpush2.msra.mxu0 0.0
  %712 = vmatprep.subr.mxu0 0.0
  %713 = vmatpush2.msra.mxu0 0.0
  %714 = vmatprep.subr.mxu0 0.0
  %715 = vmatpush2.msra.mxu0 0.0
  %716 = vmatprep.subr.mxu0 0.0
  %717 = vmatpush2.msra.mxu0 0.0
  %718 = vmatprep.subr.mxu0 0.0
  %719 = vmatpush2.msra.mxu0 0.0
  %720 = vmatprep.subr.mxu0 0.0
  %721 = vmatpush2.msra.mxu0 0.0
  %722 = vmatprep.subr.mxu0 0.0
  %723 = vmatpush2.msra.mxu0 0.0
  %724 = vmatprep.subr.mxu0 0.0
  %725 = vmatpush2.msra.mxu0 0.0
  %726 = vmatprep.subr.mxu0 0.0
  %727 = vmatpush2.msra.mxu0 0.0
  %728 = vmatprep.subr.mxu0 0.0
  %729 = vmatpush2.msra.mxu0 0.0
  %730 = vmatprep.subr.mxu0 0.0
  %731 = vmatpush2.msra.mxu0 0.0
  %732 = vmatprep.mubr.f32.mxu0 0.0
  %733 = vmatmul.mubr.f32.gmra.mxu0 %v666
  %v734 = vpop.f32.mrf.mxu0
  %v735 = vadd.f32 0.0, %v734
  %v736 = vpop.f32.mrf.mxu0
  %737 = vdwg.mxu0
  %v738 = vadd.f32 %v664, %v735
  %v739 = vtanh.pop %v738
  %v740 = vld [vmem:[%s4] sm:$0x1]
  %v742 = vlaneseq
  %v743 = vshrl.u32 %v742, 7
  %v744 = vsub.s32 0, %v743
  %v745 = vrot.slane %v740, %v744
  %v747 = vmul.f32 %v739, %v745
  %vm748 = vcmask 517120
  %v749 = vsel %vm748, %v747, 0.0
  %750 = vadd.xlane.f32.xlu0 %v749
  %v751 = vpop.xlane.xlu0 %750
  %v752 = vld [vmem:[#allocation3] sm:$0x1]
  %v754 = vlaneseq
  %v755 = vshrl.u32 %v754, 7
  %v756 = vsub.s32 0, %v755
  %v757 = vrot.slane %v752, %v756
  %v759 = vadd.f32 %v751, %v757
  %vm760 = vcmask 1024
  %761 = vst.msk [vmem:[%s6] sm:$0x3] %vm760, %v759
  // Predicated region
  $region26: #{simple_rnn_forward.1} parent=0 // pred_check
    _
  $region27: #{simple_rnn_forward.1} parent=0 // pred_check_branch
    %763 = sbr.rel (0) target = $region29
  $region28: #{simple_rnn_forward.1} parent=0 // pred_region
    _
  $region29: #{simple_rnn_forward.1} parent=0 // pred_fallthru
    _
  // Predicated region
  $region30: #{simple_rnn_forward.1} parent=0 // pred_check
    _
  $region31: #{simple_rnn_forward.1} parent=0 // pred_check_branch
    %765 = sbr.rel (0) target = $region33
  $region32: #{simple_rnn_forward.1} parent=0 // pred_region
    _
  $region33: #{simple_rnn_forward.1} parent=0 // pred_fallthru
    _

</llo_original>
